<compile_context>
chip_gen: v7x
topology: tpu7x:2x2x1
jax: 0.10.0
libtpu: 0.0.40
codegen_flags: <defaults>
</compile_context>

<pallas_src>
import functools

import jax
import jax.numpy as jnp
from jax.experimental import pallas as pl
from jax.experimental.pallas import tpu as pltpu

HIDDEN = 30          # logical hidden size of the PyTorch module
HIDDEN_PAD = 128     # lane-dense padded hidden size
OUT_PAD = 128        # lane-dense padded output size
DEFAULT_TB = 512     # batch tile (rows per grid step) for large batches


def _round_up(x, m):
    return ((x + m - 1) // m) * m


def mlp_kernel(x_ref, w1_ref, b1_ref, w2_ref, b2_ref, out_ref):
    # fc1: bf16 operands into the MXU, f32 accumulation.
    x = x_ref[...].astype(jnp.bfloat16)                       # (TB, D_in)
    h = jnp.dot(x, w1_ref[...], preferred_element_type=jnp.float32)
    # Bias + ReLU epilogue in f32 on the VPU (padded hidden cols stay 0).
    h = jnp.maximum(h + b1_ref[...], 0.0)                     # (TB, HIDDEN_PAD)
    # fc2: bf16 operands, f32 accumulation; padded w2 rows are zero.
    q = jnp.dot(h.astype(jnp.bfloat16), w2_ref[...],
                preferred_element_type=jnp.float32)           # (TB, OUT_PAD)
    out_ref[...] = (q + b2_ref[...]).astype(out_ref.dtype)


def prepare_params(w1, b1, w2, b2):
    """Pad (hidden 30->128, out nb_action->128), cast matmul weights to bf16.

    Inputs are in the pre-transposed (in_features, out_features) layout:
      w1: (input_size, 30), b1: (30,), w2: (30, nb_action), b2: (nb_action,).
    """
    input_size, hidden = w1.shape
    nb_action = w2.shape[1]

    w1p = jnp.zeros((input_size, HIDDEN_PAD), jnp.float32).at[:, :hidden].set(w1)
    b1p = jnp.zeros((1, HIDDEN_PAD), jnp.float32).at[0, :hidden].set(b1)
    w2p = jnp.zeros((HIDDEN_PAD, OUT_PAD), jnp.float32).at[:hidden, :nb_action].set(w2)
    b2p = jnp.zeros((1, OUT_PAD), jnp.float32).at[0, :nb_action].set(b2)

    return w1p.astype(jnp.bfloat16), b1p, w2p.astype(jnp.bfloat16), b2p, nb_action


@functools.partial(jax.jit, static_argnames=("nb_action", "tb"))
def network_forward(state, w1p, b1p, w2p, b2p, *, nb_action, tb=DEFAULT_TB):
    """state: (B, input_size) f32. Returns (B, nb_action) f32 q-values."""
    B, D = state.shape
    Hp = w1p.shape[1]
    Op = w2p.shape[1]

    # Batch tile: whole (sublane-rounded) batch for small B, `tb` rows otherwise.
    TB = min(tb, _round_up(B, 8))
    Bp = _round_up(B, TB)
    if Bp != B:
        state = jnp.pad(state, ((0, Bp - B), (0, 0)))

    out = pl.pallas_call(
        mlp_kernel,
        out_shape=jax.ShapeDtypeStruct((Bp, Op), jnp.float32),
        grid=(Bp // TB,),
        in_specs=[
            pl.BlockSpec((TB, D), lambda i: (i, 0)),   # activations: tiled on batch
            pl.BlockSpec((D, Hp), lambda i: (0, 0)),   # w1: resident
            pl.BlockSpec((1, Hp), lambda i: (0, 0)),   # b1: resident
            pl.BlockSpec((Hp, Op), lambda i: (0, 0)),  # w2: resident
            pl.BlockSpec((1, Op), lambda i: (0, 0)),   # b2: resident
        ],
        out_specs=pl.BlockSpec((TB, Op), lambda i: (i, 0)),
        compiler_params=pltpu.CompilerParams(
            dimension_semantics=("parallel",),  # shard batch tiles across TCs (v7x)
        ),
    )(state, w1p, b1p, w2p, b2p)

    return out[:B, :nb_action]


def init_params(key, input_size, nb_action, hidden=HIDDEN):
    # Deterministic init mimicking PyTorch's default Linear init:
    # U(-1/sqrt(fan_in), 1/sqrt(fan_in)) for both weights and biases.
    k1, k2, k3, k4 = jax.random.split(key, 4)
    bound1 = 1.0 / jnp.sqrt(jnp.float32(input_size))
    bound2 = 1.0 / jnp.sqrt(jnp.float32(hidden))
    # Stored pre-transposed: (in, out) == PyTorch W.T
    w1 = jax.random.uniform(k1, (input_size, hidden), jnp.float32, -bound1, bound1)
    b1 = jax.random.uniform(k2, (hidden,), jnp.float32, -bound1, bound1)
    w2 = jax.random.uniform(k3, (hidden, nb_action), jnp.float32, -bound2, bound2)
    b2 = jax.random.uniform(k4, (nb_action,), jnp.float32, -bound2, bound2)
    return w1, b1, w2, b2


if __name__ == "__main__":
    key = jax.random.PRNGKey(0)
    input_size, nb_action, batch = 32, 4, 8
    pkey, xkey = jax.random.split(key)

    w1, b1, w2, b2 = init_params(pkey, input_size, nb_action)
    w1p, b1p, w2p, b2p, nb_act = prepare_params(w1, b1, w2, b2)
    state = jax.random.normal(xkey, (batch, input_size), jnp.float32)

    q_values = network_forward(state, w1p, b1p, w2p, b2p, nb_action=nb_act)
    jax.block_until_ready(q_values)

    # Cross-check against a pure-JAX f32 reference of the same forward pass.
    # Tolerance is loosened because the kernel feeds bf16 operands to the MXU.
    ref = jnp.maximum(state @ w1 + b1, 0.0) @ w2 + b2
    assert q_values.shape == (batch, nb_action)
    assert jnp.allclose(q_values, ref, atol=5e-2, rtol=5e-2), (
        jnp.max(jnp.abs(q_values - ref)))

    print("KERNEL_OK")
</pallas_src>

<mosaic_0001>
module attributes {stable_mosaic.version = 11 : i64} {
  func.func @mlp_kernel(%arg0: i32, %arg1: memref<8x32xf32, #tpu.memory_space<vmem>>, %arg2: memref<32x128xbf16, #tpu.memory_space<vmem>>, %arg3: memref<1x128xf32, #tpu.memory_space<vmem>>, %arg4: memref<128x128xbf16, #tpu.memory_space<vmem>>, %arg5: memref<1x128xf32, #tpu.memory_space<vmem>>, %arg6: memref<8x128xf32, #tpu.memory_space<vmem>>) attributes {dimension_semantics = [#tpu.dimension_semantics<parallel>], iteration_bounds = array<i64: 1>, scalar_prefetch = 0 : i64, scratch_operands = 0 : i64, tpu.core_type = #tpu.core_type<tc>, window_params = [{transform_indices = @transform_0, window_bounds = array<i64: 8, 32>}, {pipeline_mode = #tpu.pipeline_mode<synchronous>, transform_indices = @transform_1, window_bounds = array<i64: 32, 128>}, {pipeline_mode = #tpu.pipeline_mode<synchronous>, transform_indices = @transform_2, window_bounds = array<i64: 1, 128>}, {pipeline_mode = #tpu.pipeline_mode<synchronous>, transform_indices = @transform_3, window_bounds = array<i64: 128, 128>}, {pipeline_mode = #tpu.pipeline_mode<synchronous>, transform_indices = @transform_4, window_bounds = array<i64: 1, 128>}, {transform_indices = @transform_5, window_bounds = array<i64: 8, 128>}]} {
    %c0 = arith.constant 0 : index
    %c0_0 = arith.constant 0 : index
    %0 = vector.load %arg1[%c0, %c0_0] : memref<8x32xf32, #tpu.memory_space<vmem>>, vector<8x32xf32>
    %1 = arith.truncf %0 : vector<8x32xf32> to vector<8x32xbf16>
    %c0_1 = arith.constant 0 : index
    %c0_2 = arith.constant 0 : index
    %2 = vector.load %arg2[%c0_1, %c0_2] : memref<32x128xbf16, #tpu.memory_space<vmem>>, vector<32x128xbf16>
    %cst = arith.constant dense<0.000000e+00> : vector<8x128xf32>
    %3 = tpu.matmul %1, %2, %cst {dimension_numbers = #tpu.dot_dimension_numbers<[1], [0], [0], [1], [0, 0, 1, 1], [], []>} : vector<8x32xbf16>, vector<32x128xbf16>, vector<8x128xf32> -> vector<8x128xf32>
    %c0_3 = arith.constant 0 : index
    %c0_4 = arith.constant 0 : index
    %4 = vector.load %arg3[%c0_3, %c0_4] : memref<1x128xf32, #tpu.memory_space<vmem>>, vector<1x128xf32>
    %5 = vector.broadcast %4 : vector<1x128xf32> to vector<8x128xf32>
    %6 = arith.addf %3, %5 : vector<8x128xf32>
    %cst_5 = arith.constant 0.000000e+00 : f32
    %7 = vector.broadcast %cst_5 : f32 to vector<8x128xf32>
    %8 = arith.maximumf %6, %7 : vector<8x128xf32>
    %9 = arith.truncf %8 : vector<8x128xf32> to vector<8x128xbf16>
    %c0_6 = arith.constant 0 : index
    %c0_7 = arith.constant 0 : index
    %10 = vector.load %arg4[%c0_6, %c0_7] : memref<128x128xbf16, #tpu.memory_space<vmem>>, vector<128x128xbf16>
    %cst_8 = arith.constant dense<0.000000e+00> : vector<8x128xf32>
    %11 = tpu.matmul %9, %10, %cst_8 {dimension_numbers = #tpu.dot_dimension_numbers<[1], [0], [0], [1], [0, 0, 1, 1], [], []>} : vector<8x128xbf16>, vector<128x128xbf16>, vector<8x128xf32> -> vector<8x128xf32>
    %c0_9 = arith.constant 0 : index
    %c0_10 = arith.constant 0 : index
    %12 = vector.load %arg5[%c0_9, %c0_10] : memref<1x128xf32, #tpu.memory_space<vmem>>, vector<1x128xf32>
    %13 = vector.broadcast %12 : vector<1x128xf32> to vector<8x128xf32>
    %14 = arith.addf %11, %13 : vector<8x128xf32>
    %c0_11 = arith.constant 0 : index
    %c0_12 = arith.constant 0 : index
    %15 = vector.load %arg6[%c0_11, %c0_12] : memref<8x128xf32, #tpu.memory_space<vmem>>, vector<8x128xf32>
    tpu.vector_store %arg6[%c0_11, %c0_12], %14 {strides = array<i32>} : memref<8x128xf32, #tpu.memory_space<vmem>>, vector<8x128xf32>,
    return
  }
  func.func @transform_0(%arg0: i32) -> (i32, i32) {
    %c0_i32 = arith.constant 0 : i32
    %c0_i32_0 = arith.constant 0 : i32
    return %arg0, %c0_i32 : i32, i32
  }
  func.func @transform_1(%arg0: i32) -> (i32, i32) {
    %c0_i32 = arith.constant 0 : i32
    %c0_i32_0 = arith.constant 0 : i32
    %c0_i32_1 = arith.constant 0 : i32
    return %c0_i32, %c0_i32_0 : i32, i32
  }
  func.func @transform_2(%arg0: i32) -> (i32, i32) {
    %c0_i32 = arith.constant 0 : i32
    %c0_i32_0 = arith.constant 0 : i32
    %c0_i32_1 = arith.constant 0 : i32
    return %c0_i32, %c0_i32_0 : i32, i32
  }
  func.func @transform_3(%arg0: i32) -> (i32, i32) {
    %c0_i32 = arith.constant 0 : i32
    %c0_i32_0 = arith.constant 0 : i32
    %c0_i32_1 = arith.constant 0 : i32
    return %c0_i32, %c0_i32_0 : i32, i32
  }
  func.func @transform_4(%arg0: i32) -> (i32, i32) {
    %c0_i32 = arith.constant 0 : i32
    %c0_i32_0 = arith.constant 0 : i32
    %c0_i32_1 = arith.constant 0 : i32
    return %c0_i32, %c0_i32_0 : i32, i32
  }
  func.func @transform_5(%arg0: i32) -> (i32, i32) {
    %c0_i32 = arith.constant 0 : i32
    %c0_i32_0 = arith.constant 0 : i32
    return %arg0, %c0_i32 : i32, i32
  }
}

</mosaic_0001>

<llo_original>
// kernel: network_forward.1
$region0: #{network_forward.1}
  #allocation0 [shape = 'u32[]', space=smem, size = 0x4, offset = 0x4, fixed_abs, tag = 'smem constant byte address 0x4 - core index']
  #allocation1 [shape = 'u32[144,128]{1,0:T(1,128)}', space=vmem, size = 0x12000, scoped, tag = 'internal scratch']
  %s0 = inlined_call_operand.hbm [shape: f32[8,32], index: 0, kind: input, shape index: {}]
  %s1 = inlined_call_operand.hbm [shape: bf16[32,128], index: 1, kind: input, shape index: {}]
  %s2 = inlined_call_operand.vmem [shape: f32[1,128], index: 2, kind: input, shape index: {}]
  %s3 = inlined_call_operand.hbm [shape: bf16[128,128], index: 3, kind: input, shape index: {}]
  %s4 = inlined_call_operand.vmem [shape: f32[1,128], index: 4, kind: input, shape index: {}]
  %s5 = inlined_call_operand.vmem [shape: f32[8,128], index: 5, kind: output, shape index: {}]
  %s6 = sld [smem:[#allocation0]]
  $region42: #{network_forward.1} parent=0
    _
  %s8 = ssub.s32 1, %s6
  %s9 = scalar_select 0, %s8, %s6
  $region1: #{network_forward.1} parent=0
    #allocation2 [shape = 'u8[4096]{0}', space=vmem, size = 0x1000, scoped, tag = 'input window, operand 0, single buffered']
    #allocation3 [shape = 's32[1]{0}', space=sflag, size = 0x4, scoped, tag = 'scoped memory for network_forward.1']
    #allocation4 [shape = 'u8[8192]{0}', space=vmem, size = 0x2000, scoped, tag = 'input window, operand 1, single buffered']
    #allocation5 [shape = 's32[1]{0}', space=sflag, size = 0x4, scoped, tag = 'scoped memory for network_forward.1']
    #allocation6 [shape = 'u8[32768]{0}', space=vmem, size = 0x8000, scoped, tag = 'input window, operand 3, single buffered']
    %10 = vsyncpa [#allocation3], 0
    %11 = vsyncpa [#allocation5], 0
    // Predicated region
    $region2: #{network_forward.1} parent=1 // pred_check
      _
    $region3: #{network_forward.1} parent=1 // pred_check_branch
      %13 = sbr.rel (0) target = $region5
    $region4: #{network_forward.1} parent=1 // pred_region
      %s15 = ssub.s32 128, 128
      %16 = vsyncadd [#allocation3], %s15
      %s18 = sshll.u32 [#allocation2], 4
      %s19 = int_to_ptr.vmem [resolvable:$true] %s18
      %21 = dma.hbm_to_vmem [thread:$0]  %s0, 128, %s19, [#allocation3]
    $region5: #{network_forward.1} parent=1 // pred_fallthru
      _
    // Predicated region
    $region6: #{network_forward.1} parent=1 // pred_check
      _
    $region7: #{network_forward.1} parent=1 // pred_check_branch
      %23 = sbr.rel (0) target = $region9
    $region8: #{network_forward.1} parent=1 // pred_region
      %s25 = ssub.s32 256, 256
      %26 = vsyncadd [#allocation5], %s25
      %s27 = sshll.u32 [#allocation4], 4
      %s28 = int_to_ptr.vmem [resolvable:$true] %s27
      %33 = dma.hbm_to_vmem [thread:$0]  %s1, 256, %s28, [#allocation5], 64, 64, 4
    $region9: #{network_forward.1} parent=1 // pred_fallthru
      _
    // Predicated region
    $region10: #{network_forward.1} parent=1 // pred_check
      _
    $region11: #{network_forward.1} parent=1 // pred_check_branch
      %35 = sbr.rel (0) target = $region13
    $region12: #{network_forward.1} parent=1 // pred_region
      _
    $region13: #{network_forward.1} parent=1 // pred_fallthru
      _
    // Predicated region
    $region14: #{network_forward.1} parent=1 // pred_check
      _
    $region15: #{network_forward.1} parent=1 // pred_check_branch
      %37 = sbr.rel (0) target = $region17
    $region16: #{network_forward.1} parent=1 // pred_region
      %s39 = ssub.s32 1024, 1024
      %40 = vsyncadd [#allocation5], %s39
      %s41 = sshll.u32 [#allocation6], 4
      %s42 = int_to_ptr.vmem [resolvable:$true] %s41
      %47 = dma.hbm_to_vmem [thread:$0]  %s3, 1024, %s42, [#allocation5], 64, 64, 4
    $region17: #{network_forward.1} parent=1 // pred_fallthru
      _
    // Predicated region
    $region18: #{network_forward.1} parent=1 // pred_check
      _
    $region19: #{network_forward.1} parent=1 // pred_check_branch
      %49 = sbr.rel (0) target = $region21
    $region20: #{network_forward.1} parent=1 // pred_region
      _
    $region21: #{network_forward.1} parent=1 // pred_fallthru
      _
    // Predicated region
    $region22: #{network_forward.1} parent=1 // pred_check
      _
    $region23: #{network_forward.1} parent=1 // pred_check_branch
      %51 = sbr.rel (0) target = $region25
    $region24: #{network_forward.1} parent=1 // pred_region
      %52 = dma.done [#allocation3], 128
    $region25: #{network_forward.1} parent=1 // pred_fallthru
      _
    // Predicated region
    $region26: #{network_forward.1} parent=1 // pred_check
      _
    $region27: #{network_forward.1} parent=1 // pred_check_branch
      %54 = sbr.rel (0) target = $region29
    $region28: #{network_forward.1} parent=1 // pred_region
      %55 = dma.done [#allocation5], 256
    $region29: #{network_forward.1} parent=1 // pred_fallthru
      _
    // Predicated region
    $region30: #{network_forward.1} parent=1 // pred_check
      _
    $region31: #{network_forward.1} parent=1 // pred_check_branch
      %57 = sbr.rel (0) target = $region33
    $region32: #{network_forward.1} parent=1 // pred_region
      %58 = dma.done [#allocation5], 1024
    $region33: #{network_forward.1} parent=1 // pred_fallthru
      _
    %v60 = vld [vmem:[#allocation2] sm:$0xff]
    %v61 = vpack.c.bf16 %v60, %v60
    %v62 = vld [vmem:[#allocation4] sm:$0xf]
    %v63 = vld [vmem:[#allocation4 + $0x4] sm:$0xf]
    %v64 = vld [vmem:[#allocation4 + $0x8] sm:$0xf]
    %v65 = vld [vmem:[#allocation4 + $0xc] sm:$0xf]
    %v66 = vld [vmem:[%s2] sm:$0x1]
    %v68 = vlaneseq
    %v69 = vshrl.u32 %v68, 7
    %v70 = vsub.s32 0, %v69
    %v71 = vrot.slane %v66, %v70
    %v77 = vunpack.c.l.b16 %v62
    %v78 = vunpack.c.l.b16 %v63
    %v79 = vunpack.c.l.b16 %v64
    %v80 = vunpack.c.l.b16 %v65
    %v81 = vpack.c.b16 %v78, %v77
    %v82 = vpack.c.b16 %v80, %v79
    %vm85 = vcmask 261120
    %v87 = vsel %vm85, %v61, 0
    %89 = vmatprep.subr.bf16.mxu0 0
    %90 = vmatpush1.bf16.msra.mxu0 %v81
    %91 = vmatprep.subr.bf16.mxu0 0
    %92 = vmatpush1.bf16.msra.mxu0 %v82
    %93 = vmatprep.subr.bf16.mxu0 0
    %94 = vmatpush1.bf16.msra.mxu0 0
    %95 = vmatprep.subr.bf16.mxu0 0
    %96 = vmatpush1.bf16.msra.mxu0 0
    %97 = vmatprep.subr.bf16.mxu0 0
    %98 = vmatpush1.bf16.msra.mxu0 0
    %99 = vmatprep.subr.bf16.mxu0 0
    %100 = vmatpush1.bf16.msra.mxu0 0
    %101 = vmatprep.subr.bf16.mxu0 0
    %102 = vmatpush1.bf16.msra.mxu0 0
    %103 = vmatprep.subr.bf16.mxu0 0
    %104 = vmatpush1.bf16.msra.mxu0 0
    %105 = vmatprep.subr.bf16.mxu0 0
    %106 = vmatpush1.bf16.msra.mxu0 0
    %107 = vmatprep.subr.bf16.mxu0 0
    %108 = vmatpush1.bf16.msra.mxu0 0
    %109 = vmatprep.subr.bf16.mxu0 0
    %110 = vmatpush1.bf16.msra.mxu0 0
    %111 = vmatprep.subr.bf16.mxu0 0
    %112 = vmatpush1.bf16.msra.mxu0 0
    %113 = vmatprep.subr.bf16.mxu0 0
    %114 = vmatpush1.bf16.msra.mxu0 0
    %115 = vmatprep.subr.bf16.mxu0 0
    %116 = vmatpush1.bf16.msra.mxu0 0
    %117 = vmatprep.subr.bf16.mxu0 0
    %118 = vmatpush1.bf16.msra.mxu0 0
    %119 = vmatprep.subr.bf16.mxu0 0
    %120 = vmatpush1.bf16.msra.mxu0 0
    %121 = vmatprep.mubr.bf16.mxu0 0
    %122 = vmatmul.mubr.bf16.gmra.mrb[0].mxu0 %v87
    %v123 = vpop.f32.mrb[0].mxu0
    %v124 = vadd.f32 %v71, %v123
    %v125 = vpop.f32.mrb[0].mxu0
    %v126 = vpop.f32.mrb[0].mxu0
    %v127 = vpop.f32.mrb[0].mxu0
    %128 = vdwg.mxu0
    %v129 = vmax.f32 %v124, 0.0
    %v130 = vpack.c.bf16 %v129, %v129
    %v131 = vld [vmem:[#allocation6] sm:$0xf]
    %v132 = vld [vmem:[#allocation6 + $0x4] sm:$0xf]
    %v133 = vld [vmem:[#allocation6 + $0x8] sm:$0xf]
    %v134 = vld [vmem:[#allocation6 + $0xc] sm:$0xf]
    %v135 = vld [vmem:[#allocation6 + $0x10] sm:$0xf]
    %v136 = vld [vmem:[#allocation6 + $0x14] sm:$0xf]
    %v137 = vld [vmem:[#allocation6 + $0x18] sm:$0xf]
    %v138 = vld [vmem:[#allocation6 + $0x1c] sm:$0xf]
    %v139 = vld [vmem:[#allocation6 + $0x20] sm:$0xf]
    %v140 = vld [vmem:[#allocation6 + $0x24] sm:$0xf]
    %v141 = vld [vmem:[#allocation6 + $0x28] sm:$0xf]
    %v142 = vld [vmem:[#allocation6 + $0x2c] sm:$0xf]
    %v143 = vld [vmem:[#allocation6 + $0x30] sm:$0xf]
    %v144 = vld [vmem:[#allocation6 + $0x34] sm:$0xf]
    %v145 = vld [vmem:[#allocation6 + $0x38] sm:$0xf]
    %v146 = vld [vmem:[#allocation6 + $0x3c] sm:$0xf]
    %v147 = vld [vmem:[%s4] sm:$0x1]
    %v149 = vlaneseq
    %v150 = vshrl.u32 %v149, 7
    %v151 = vsub.s32 0, %v150
    %v152 = vrot.slane %v147, %v151
    %v170 = vunpack.c.l.b16 %v131
    %v171 = vunpack.c.l.b16 %v132
    %v172 = vunpack.c.l.b16 %v133
    %v173 = vunpack.c.l.b16 %v134
    %v174 = vunpack.c.l.b16 %v135
    %v175 = vunpack.c.l.b16 %v136
    %v176 = vunpack.c.l.b16 %v137
    %v177 = vunpack.c.l.b16 %v138
    %v178 = vunpack.c.l.b16 %v139
    %v179 = vunpack.c.l.b16 %v140
    %v180 = vunpack.c.l.b16 %v141
    %v181 = vunpack.c.l.b16 %v142
    %v182 = vunpack.c.l.b16 %v143
    %v183 = vunpack.c.l.b16 %v144
    %v184 = vunpack.c.l.b16 %v145
    %v185 = vunpack.c.l.b16 %v146
    %v186 = vpack.c.b16 %v171, %v170
    %v187 = vpack.c.b16 %v173, %v172
    %v188 = vpack.c.b16 %v175, %v174
    %v189 = vpack.c.b16 %v177, %v176
    %v190 = vpack.c.b16 %v179, %v178
    %v191 = vpack.c.b16 %v181, %v180
    %v192 = vpack.c.b16 %v183, %v182
    %v193 = vpack.c.b16 %v185, %v184
    %202 = vmatprep.subr.bf16.mxu0 0
    %203 = vmatpush1.bf16.msra.mxu0 %v186
    %204 = vmatprep.subr.bf16.mxu0 0
    %205 = vmatpush1.bf16.msra.mxu0 %v187
    %206 = vmatprep.subr.bf16.mxu0 0
    %207 = vmatpush1.bf16.msra.mxu0 %v188
    %208 = vmatprep.subr.bf16.mxu0 0
    %209 = vmatpush1.bf16.msra.mxu0 %v189
    %210 = vmatprep.subr.bf16.mxu0 0
    %211 = vmatpush1.bf16.msra.mxu0 %v190
    %212 = vmatprep.subr.bf16.mxu0 0
    %213 = vmatpush1.bf16.msra.mxu0 %v191
    %214 = vmatprep.subr.bf16.mxu0 0
    %215 = vmatpush1.bf16.msra.mxu0 %v192
    %216 = vmatprep.subr.bf16.mxu0 0
    %217 = vmatpush1.bf16.msra.mxu0 %v193
    %218 = vmatprep.subr.bf16.mxu0 0
    %219 = vmatpush1.bf16.msra.mxu0 0
    %220 = vmatprep.subr.bf16.mxu0 0
    %221 = vmatpush1.bf16.msra.mxu0 0
    %222 = vmatprep.subr.bf16.mxu0 0
    %223 = vmatpush1.bf16.msra.mxu0 0
    %224 = vmatprep.subr.bf16.mxu0 0
    %225 = vmatpush1.bf16.msra.mxu0 0
    %226 = vmatprep.subr.bf16.mxu0 0
    %227 = vmatpush1.bf16.msra.mxu0 0
    %228 = vmatprep.subr.bf16.mxu0 0
    %229 = vmatpush1.bf16.msra.mxu0 0
    %230 = vmatprep.subr.bf16.mxu0 0
    %231 = vmatpush1.bf16.msra.mxu0 0
    %232 = vmatprep.subr.bf16.mxu0 0
    %233 = vmatpush1.bf16.msra.mxu0 0
    %234 = vmatprep.mubr.bf16.mxu0 0
    %235 = vmatmul.mubr.bf16.gmra.mrb[0].mxu0 %v130
    %v236 = vpop.f32.mrb[0].mxu0
    %v237 = vadd.f32 %v152, %v236
    %v238 = vpop.f32.mrb[0].mxu0
    %v239 = vpop.f32.mrb[0].mxu0
    %v240 = vpop.f32.mrb[0].mxu0
    %241 = vdwg.mxu0
    %242 = vst [vmem:[%s5] sm:$0xff] %v237
    // Predicated region
    $region34: #{network_forward.1} parent=1 // pred_check
      _
    $region35: #{network_forward.1} parent=1 // pred_check_branch
      %244 = sbr.rel (0) target = $region37
    $region36: #{network_forward.1} parent=1 // pred_region
      _
    $region37: #{network_forward.1} parent=1 // pred_fallthru
      _
    // Predicated region
    $region38: #{network_forward.1} parent=1 // pred_check
      _
    $region39: #{network_forward.1} parent=1 // pred_check_branch
      %246 = sbr.rel (0) target = $region41
    $region40: #{network_forward.1} parent=1 // pred_region
      _
    $region41: #{network_forward.1} parent=1 // pred_fallthru
      _
    %247 = vsyncpa [#allocation3], 1
    %248 = vsyncpa [#allocation5], 1

</llo_original>
